<compile_context>
chip_gen: v7x
topology: tpu7x:2x2x1
jax: 0.10.0
libtpu: 0.0.40
codegen_flags: <defaults>
</compile_context>

<pallas_src>
import math
import functools

import jax
import jax.numpy as jnp
from jax.experimental import pallas as pl
from jax.experimental.pallas import tpu as pltpu


LANE = 128


def _round_up(x, m):
    return ((x + m - 1) // m) * m


# ----------------------------- Pallas kernel ------------------------------ #
def _qformer_xattn_kernel(x_ref, wqv_ref, wo_ref, bo_ref, o_ref, *,
                          batch_block, seq_len, num_queries,
                          bp_num_heads, bp_head_dim):
    """One batch-block per grid step.

    x_ref   : (BB, S, H)            bf16 hidden states
    wqv_ref : (H, Hp*Q + Hp*Dp)     bf16 fused logit+value weights (head-major,
                                    1/sqrt(Dp) already folded into logit cols)
    wo_ref  : (Hp*Dp, P)            bf16 output projection, lane-padded
    bo_ref  : (1, P)                f32 effective output bias (bv folded in)
    o_ref   : (BB, Q, P)            f32 output (lane-padded)
    """
    BB, S = batch_block, seq_len
    Q, Hp, Dp = num_queries, bp_num_heads, bp_head_dim
    HpQ = Hp * Q

    # ---- fused projections: one matmul over BB*S rows on the MXU ----
    x2d = x_ref[...].reshape(BB * S, x_ref.shape[-1])              # bf16
    proj = jnp.dot(x2d, wqv_ref[...],
                   preferred_element_type=jnp.float32)             # (BB*S, HpQ+HpDp) f32

    logits = proj[:, :HpQ].reshape(BB, S, HpQ)                     # head-major [h, q]
    vals = proj[:, HpQ:].reshape(BB, S, Hp * Dp)                   # head-major [h, d]

    # ---- softmax over S on the whole slab (lane-dense), f32 math ----
    m = jnp.max(logits, axis=1, keepdims=True)                     # (BB, 1, HpQ)  XLU
    e = jnp.exp(logits - m)                                        # EUP
    denom = jnp.sum(e, axis=1, keepdims=True)                      # (BB, 1, HpQ)
    recip = pl.reciprocal(denom, approx=True)                      # EUP slot
    p = (e * recip).astype(jnp.bfloat16)                           # (BB, S, HpQ)
    v = vals.astype(jnp.bfloat16)                                  # (BB, S, Hp*Dp)

    wo = wo_ref[...]                                               # (Hp*Dp, P) bf16

    # ---- per-head attention + accumulated output projection (no concat) ----
    acc = None
    for h in range(Hp):                                            # Hp small: static unroll
        p_h = p[:, :, h * Q:(h + 1) * Q]                           # (BB, S, Q)
        v_h = v[:, :, h * Dp:(h + 1) * Dp]                         # (BB, S, Dp)
        oh = jnp.einsum('bsq,bsd->bqd', p_h, v_h,
                        preferred_element_type=jnp.float32)        # (BB, Q, Dp) f32
        wo_h = wo[h * Dp:(h + 1) * Dp, :]                          # (Dp, P) contiguous rows
        contrib = jnp.einsum('bqd,dn->bqn', oh.astype(jnp.bfloat16), wo_h,
                             preferred_element_type=jnp.float32)   # (BB, Q, P)
        acc = contrib if acc is None else acc + contrib

    o_ref[...] = acc + bo_ref[...]                                 # lane-dense store


# ----------------------- one-time parameter preparation --------------------- #
def prepare_qformer_params(params, *, num_queries, bp_num_heads, bp_head_dim):
    """Hoisted out of the per-call path. Converts torch-layout Linear weights
    (out_features, in_features) into the fused / folded / padded kernel layout.
    Call once at parameter-load time."""
    Q, Hp, Dp = num_queries, bp_num_heads, bp_head_dim
    BPH = params["wo"].shape[0]
    H = params["ww"].shape[1]
    P = _round_up(BPH, LANE)

    scale = 1.0 / math.sqrt(Dp)

    # q_former_weights: torch col f = q*Hp + h  ->  head-major h*Q + q.
    # Fold the 1/sqrt(Dp) scale into the weights.
    ww = jnp.transpose(params["ww"]).reshape(H, Q, Hp)
    ww = ww.transpose(0, 2, 1).reshape(H, Hp * Q) * scale
    # bw is a per-(q,h) constant along the softmax (S) axis -> no-op; dropped.

    # q_former_v_proj: torch col f = h*Dp + d is already head-major.
    wv = jnp.transpose(params["wv"])                              # (H, Hp*Dp)

    # Fused projection weight: a single matmul produces logits and values.
    w_fused = jnp.concatenate([ww, wv], axis=1).astype(jnp.bfloat16)   # (H, HpQ+HpDp)

    # q_former_o_proj: fold bv (softmax weights sum to 1), pad to lane-dense width.
    wo_t = jnp.transpose(params["wo"])                            # (Hp*Dp, BPH)
    bo_eff = params["bo"] + params["bv"] @ wo_t                   # (BPH,)
    wo_pad = jnp.zeros((Hp * Dp, P), jnp.float32).at[:, :BPH].set(wo_t)
    wo_pad = wo_pad.astype(jnp.bfloat16)
    bo_pad = jnp.zeros((1, P), jnp.float32).at[0, :BPH].set(bo_eff)

    return {"w_fused": w_fused, "wo_pad": wo_pad, "bo_pad": bo_pad,
            "bph": BPH, "bph_pad": P}


def _choose_batch_block(batch, seq_len):
    """Largest divisor of `batch` with block*seq <~ 128 rows (fills the MXU M
    dim), while keeping >=2 grid steps when possible so both v7x TensorCores
    (and the software pipeline) get work."""
    target = max(1, LANE // max(seq_len, 1))
    divisors = [d for d in range(1, batch + 1) if batch % d == 0]
    cands = [d for d in divisors if d <= target and batch // d >= 2]
    if not cands:
        cands = [d for d in divisors if d <= target] or [1]
    return max(cands)


# ------------------------------- wrapper ----------------------------------- #
def text_qformer_cross_attention(hidden_states, prepped, *, num_queries,
                                 bp_num_heads, bp_head_dim):
    """hidden_states: (B, S, H) float32. `prepped` from prepare_qformer_params."""
    B, S, H = hidden_states.shape
    Q, Hp, Dp = num_queries, bp_num_heads, bp_head_dim
    BPH, P = prepped["bph"], prepped["bph_pad"]
    W_cols = Hp * Q + Hp * Dp

    BB = _choose_batch_block(B, S)
    x_bf = hidden_states.astype(jnp.bfloat16)     # halve x DMA into the kernel

    kernel = functools.partial(
        _qformer_xattn_kernel,
        batch_block=BB, seq_len=S, num_queries=Q,
        bp_num_heads=Hp, bp_head_dim=Dp)

    grid_spec = pltpu.PrefetchScalarGridSpec(
        num_scalar_prefetch=0,
        grid=(B // BB,),
        in_specs=[
            pl.BlockSpec((BB, S, H), lambda b: (b, 0, 0)),
            pl.BlockSpec((H, W_cols), lambda b: (0, 0)),        # weights resident
            pl.BlockSpec((Hp * Dp, P), lambda b: (0, 0)),
            pl.BlockSpec((1, P), lambda b: (0, 0)),
        ],
        out_specs=pl.BlockSpec((BB, Q, P), lambda b: (b, 0, 0)),
    )

    out_padded = pl.pallas_call(
        kernel,
        out_shape=jax.ShapeDtypeStruct((B, Q, P), jnp.float32),
        grid_spec=grid_spec,
        compiler_params=pltpu.CompilerParams(
            dimension_semantics=("parallel",)),
    )(x_bf, prepped["w_fused"], prepped["wo_pad"], prepped["bo_pad"])

    return out_padded[:, :, :BPH]


# ----------------------------- pure-JAX reference -------------------------- #
def reference_forward(x, params, *, num_queries, bp_num_heads, bp_head_dim):
    B, S, H = x.shape
    Q, Hp, Dp = num_queries, bp_num_heads, bp_head_dim
    aw = (x @ params["ww"].T + params["bw"]).reshape(B, S, Q, Hp)
    aw = aw.transpose(0, 3, 2, 1)                                 # (B, Hp, Q, S)
    v = (x @ params["wv"].T + params["bv"]).reshape(B, S, Hp, Dp)
    v = v.transpose(0, 2, 1, 3)                                   # (B, Hp, S, Dp)
    aw = aw / math.sqrt(Dp)
    p = jax.nn.softmax(aw.astype(jnp.float32), axis=-1).astype(v.dtype)
    ao = jnp.einsum("bhqs,bhsd->bhqd", p, v)
    ao = ao.transpose(0, 2, 1, 3).reshape(B, Q, Hp * Dp)
    return ao @ params["wo"].T + params["bo"]


# ---------------------------------- main ----------------------------------- #
if __name__ == "__main__":
    # Small synthetic config (save_mem=True branch). batch=8 so the batch
    # blocking path (BB=4, grid of 2) is actually exercised.
    B, S, H = 8, 8, 32            # batch, seq, hidden_size
    Q = 8                         # num_queries
    Hp, Dp = 2, 8                 # by_pass_num_heads, by_pass_head_dim
    BPH = Hp * Dp                 # by_pass_hidden_size

    key = jax.random.PRNGKey(0)
    kx, k1, k2, k3, k4, k5, k6 = jax.random.split(key, 7)

    x = jax.random.normal(kx, (B, S, H), dtype=jnp.float32)

    # torch Linear layout: (out_features, in_features).
    params = {
        "ww": jax.random.normal(k1, (Q * Hp, H), dtype=jnp.float32) * (1.0 / math.sqrt(H)),
        "bw": jax.random.normal(k2, (Q * Hp,), dtype=jnp.float32) * 0.02,
        "wv": jax.random.normal(k3, (Hp * Dp, H), dtype=jnp.float32) * (1.0 / math.sqrt(H)),
        "bv": jax.random.normal(k4, (Hp * Dp,), dtype=jnp.float32) * 0.02,
        "wo": jax.random.normal(k5, (BPH, Hp * Dp), dtype=jnp.float32) * (1.0 / math.sqrt(BPH)),
        "bo": jax.random.normal(k6, (BPH,), dtype=jnp.float32) * 0.02,
    }

    # One-time weight prep (fold biases/scale, fuse, pad, cast) — outside hot path.
    prepped = prepare_qformer_params(
        params, num_queries=Q, bp_num_heads=Hp, bp_head_dim=Dp)

    out = text_qformer_cross_attention(
        x, prepped, num_queries=Q, bp_num_heads=Hp, bp_head_dim=Dp)
    out = jax.block_until_ready(out)

    ref = reference_forward(
        x, params, num_queries=Q, bp_num_heads=Hp, bp_head_dim=Dp)
    assert out.shape == (B, Q, BPH)
    # bf16 MXU inputs + approx reciprocal -> loosened tolerance vs f32 reference.
    max_diff = jnp.max(jnp.abs(out - ref))
    assert jnp.allclose(out, ref, atol=5e-2, rtol=5e-2), f"mismatch vs reference: {max_diff}"

    print("KERNEL_OK")
</pallas_src>

<mosaic_0001>
module attributes {stable_mosaic.version = 11 : i64} {
  func.func @_qformer_xattn_kernel(%arg0: i32, %arg1: memref<4x8x32xbf16, #tpu.memory_space<vmem>>, %arg2: memref<32x32xbf16, #tpu.memory_space<vmem>>, %arg3: memref<16x128xbf16, #tpu.memory_space<vmem>>, %arg4: memref<1x128xf32, #tpu.memory_space<vmem>>, %arg5: memref<4x8x128xf32, #tpu.memory_space<vmem>>) attributes {dimension_semantics = [#tpu.dimension_semantics<parallel>], iteration_bounds = array<i64: 2>, scalar_prefetch = 0 : i64, scratch_operands = 0 : i64, tpu.core_type = #tpu.core_type<tc>, window_params = [{transform_indices = @transform_0, window_bounds = array<i64: 4, 8, 32>}, {pipeline_mode = #tpu.pipeline_mode<synchronous>, transform_indices = @transform_1, window_bounds = array<i64: 32, 32>}, {pipeline_mode = #tpu.pipeline_mode<synchronous>, transform_indices = @transform_2, window_bounds = array<i64: 16, 128>}, {pipeline_mode = #tpu.pipeline_mode<synchronous>, transform_indices = @transform_3, window_bounds = array<i64: 1, 128>}, {transform_indices = @transform_4, window_bounds = array<i64: 4, 8, 128>}]} {
    %c0 = arith.constant 0 : index
    %c0_0 = arith.constant 0 : index
    %c0_1 = arith.constant 0 : index
    %0 = vector.load %arg1[%c0, %c0_0, %c0_1] : memref<4x8x32xbf16, #tpu.memory_space<vmem>>, vector<4x8x32xbf16>
    %1 = vector.shape_cast %0 : vector<4x8x32xbf16> to vector<32x32xbf16>
    %c0_2 = arith.constant 0 : index
    %c0_3 = arith.constant 0 : index
    %2 = vector.load %arg2[%c0_2, %c0_3] : memref<32x32xbf16, #tpu.memory_space<vmem>>, vector<32x32xbf16>
    %cst = arith.constant dense<0.000000e+00> : vector<32x32xf32>
    %3 = tpu.matmul %1, %2, %cst {dimension_numbers = #tpu.dot_dimension_numbers<[1], [0], [0], [1], [0, 0, 1, 1], [], []>} : vector<32x32xbf16>, vector<32x32xbf16>, vector<32x32xf32> -> vector<32x32xf32>
    %4 = vector.extract_strided_slice %3 {offsets = [0, 0], sizes = [32, 16], strides = [1, 1]} : vector<32x32xf32> to vector<32x16xf32>
    %5 = vector.shape_cast %4 : vector<32x16xf32> to vector<4x8x16xf32>
    %6 = vector.extract_strided_slice %3 {offsets = [0, 16], sizes = [32, 16], strides = [1, 1]} : vector<32x32xf32> to vector<32x16xf32>
    %7 = vector.shape_cast %6 : vector<32x16xf32> to vector<4x8x16xf32>
    %cst_4 = arith.constant dense<0xFF800000> : vector<4x16xf32>
    %8 = vector.multi_reduction <maximumf>, %5, %cst_4 [1] : vector<4x8x16xf32> to vector<4x16xf32>
    %9 = vector.shape_cast %8 : vector<4x16xf32> to vector<4x1x16xf32>
    %10 = vector.broadcast %9 : vector<4x1x16xf32> to vector<4x8x16xf32>
    %11 = arith.subf %5, %10 : vector<4x8x16xf32>
    %12 = math.exp %11 : vector<4x8x16xf32>
    %cst_5 = arith.constant dense<0.000000e+00> : vector<4x16xf32>
    %13 = vector.multi_reduction <add>, %12, %cst_5 [1] : vector<4x8x16xf32> to vector<4x16xf32>
    %14 = vector.shape_cast %13 : vector<4x16xf32> to vector<4x1x16xf32>
    %15 = tpu.reciprocal %14 {approx = true} : vector<4x1x16xf32> -> vector<4x1x16xf32>
    %16 = vector.broadcast %15 : vector<4x1x16xf32> to vector<4x8x16xf32>
    %17 = arith.mulf %12, %16 : vector<4x8x16xf32>
    %18 = arith.truncf %17 : vector<4x8x16xf32> to vector<4x8x16xbf16>
    %19 = arith.truncf %7 : vector<4x8x16xf32> to vector<4x8x16xbf16>
    %c0_6 = arith.constant 0 : index
    %c0_7 = arith.constant 0 : index
    %20 = vector.load %arg3[%c0_6, %c0_7] : memref<16x128xbf16, #tpu.memory_space<vmem>>, vector<16x128xbf16>
    %21 = vector.extract_strided_slice %18 {offsets = [0, 0, 0], sizes = [4, 8, 8], strides = [1, 1, 1]} : vector<4x8x16xbf16> to vector<4x8x8xbf16>
    %22 = vector.extract_strided_slice %19 {offsets = [0, 0, 0], sizes = [4, 8, 8], strides = [1, 1, 1]} : vector<4x8x16xbf16> to vector<4x8x8xbf16>
    "tpu.trace_start"() <{level = 10 : i32, message = "bsq,bsd->bqd"}> : () -> ()
    %cst_8 = arith.constant dense<0.000000e+00> : vector<4x8x8xf32>
    %23 = tpu.matmul %21, %22, %cst_8 {dimension_numbers = #tpu.dot_dimension_numbers<[1], [1], [2], [2], [0, 0, 0, 2, 1, 2], [0], [0]>} : vector<4x8x8xbf16>, vector<4x8x8xbf16>, vector<4x8x8xf32> -> vector<4x8x8xf32>
    "tpu.trace_stop"() : () -> ()
    %24 = vector.extract_strided_slice %20 {offsets = [0, 0], sizes = [8, 128], strides = [1, 1]} : vector<16x128xbf16> to vector<8x128xbf16>
    %25 = arith.truncf %23 : vector<4x8x8xf32> to vector<4x8x8xbf16>
    "tpu.trace_start"() <{level = 10 : i32, message = "bqd,dn->bqn"}> : () -> ()
    %cst_9 = arith.constant dense<0.000000e+00> : vector<4x8x128xf32>
    %26 = tpu.matmul %25, %24, %cst_9 {dimension_numbers = #tpu.dot_dimension_numbers<[2], [0], [0, 1], [1], [0, 0, 0, 1, 1, 1], [], []>} : vector<4x8x8xbf16>, vector<8x128xbf16>, vector<4x8x128xf32> -> vector<4x8x128xf32>
    "tpu.trace_stop"() : () -> ()
    %27 = vector.extract_strided_slice %18 {offsets = [0, 0, 8], sizes = [4, 8, 8], strides = [1, 1, 1]} : vector<4x8x16xbf16> to vector<4x8x8xbf16>
    %28 = vector.extract_strided_slice %19 {offsets = [0, 0, 8], sizes = [4, 8, 8], strides = [1, 1, 1]} : vector<4x8x16xbf16> to vector<4x8x8xbf16>
    "tpu.trace_start"() <{level = 10 : i32, message = "bsq,bsd->bqd"}> : () -> ()
    %cst_10 = arith.constant dense<0.000000e+00> : vector<4x8x8xf32>
    %29 = tpu.matmul %27, %28, %cst_10 {dimension_numbers = #tpu.dot_dimension_numbers<[1], [1], [2], [2], [0, 0, 0, 2, 1, 2], [0], [0]>} : vector<4x8x8xbf16>, vector<4x8x8xbf16>, vector<4x8x8xf32> -> vector<4x8x8xf32>
    "tpu.trace_stop"() : () -> ()
    %30 = vector.extract_strided_slice %20 {offsets = [8, 0], sizes = [8, 128], strides = [1, 1]} : vector<16x128xbf16> to vector<8x128xbf16>
    %31 = arith.truncf %29 : vector<4x8x8xf32> to vector<4x8x8xbf16>
    "tpu.trace_start"() <{level = 10 : i32, message = "bqd,dn->bqn"}> : () -> ()
    %cst_11 = arith.constant dense<0.000000e+00> : vector<4x8x128xf32>
    %32 = tpu.matmul %31, %30, %cst_11 {dimension_numbers = #tpu.dot_dimension_numbers<[2], [0], [0, 1], [1], [0, 0, 0, 1, 1, 1], [], []>} : vector<4x8x8xbf16>, vector<8x128xbf16>, vector<4x8x128xf32> -> vector<4x8x128xf32>
    "tpu.trace_stop"() : () -> ()
    %33 = arith.addf %26, %32 : vector<4x8x128xf32>
    %c0_12 = arith.constant 0 : index
    %c0_13 = arith.constant 0 : index
    %34 = vector.load %arg4[%c0_12, %c0_13] : memref<1x128xf32, #tpu.memory_space<vmem>>, vector<1x128xf32>
    %35 = vector.shape_cast %34 : vector<1x128xf32> to vector<1x1x128xf32>
    %36 = vector.broadcast %35 : vector<1x1x128xf32> to vector<4x8x128xf32>
    %37 = arith.addf %33, %36 : vector<4x8x128xf32>
    %c0_14 = arith.constant 0 : index
    %c0_15 = arith.constant 0 : index
    %c0_16 = arith.constant 0 : index
    %38 = vector.load %arg5[%c0_14, %c0_15, %c0_16] : memref<4x8x128xf32, #tpu.memory_space<vmem>>, vector<4x8x128xf32>
    tpu.vector_store %arg5[%c0_14, %c0_15, %c0_16], %37 {strides = array<i32>} : memref<4x8x128xf32, #tpu.memory_space<vmem>>, vector<4x8x128xf32>,
    return
  }
  func.func @transform_0(%arg0: i32) -> (i32, i32, i32) {
    %c0_i32 = arith.constant 0 : i32
    %c0_i32_0 = arith.constant 0 : i32
    %c0_i32_1 = arith.constant 0 : i32
    return %arg0, %c0_i32, %c0_i32_0 : i32, i32, i32
  }
  func.func @transform_1(%arg0: i32) -> (i32, i32) {
    %c0_i32 = arith.constant 0 : i32
    %c0_i32_0 = arith.constant 0 : i32
    %c0_i32_1 = arith.constant 0 : i32
    return %c0_i32, %c0_i32_0 : i32, i32
  }
  func.func @transform_2(%arg0: i32) -> (i32, i32) {
    %c0_i32 = arith.constant 0 : i32
    %c0_i32_0 = arith.constant 0 : i32
    %c0_i32_1 = arith.constant 0 : i32
    return %c0_i32, %c0_i32_0 : i32, i32
  }
  func.func @transform_3(%arg0: i32) -> (i32, i32) {
    %c0_i32 = arith.constant 0 : i32
    %c0_i32_0 = arith.constant 0 : i32
    %c0_i32_1 = arith.constant 0 : i32
    return %c0_i32, %c0_i32_0 : i32, i32
  }
  func.func @transform_4(%arg0: i32) -> (i32, i32, i32) {
    %c0_i32 = arith.constant 0 : i32
    %c0_i32_0 = arith.constant 0 : i32
    %c0_i32_1 = arith.constant 0 : i32
    return %arg0, %c0_i32, %c0_i32_0 : i32, i32, i32
  }
}

</mosaic_0001>

<llo_original>
// kernel: tpu_custom_call.1
$region0: #{tpu_custom_call.1}
  #allocation0 [shape = 'u32[]', space=smem, size = 0x4, offset = 0x4, fixed_abs, tag = 'smem constant byte address 0x4 - core index']
  #allocation1 [shape = 'u32[144,128]{1,0:T(1,128)}', space=vmem, size = 0x12000, scoped, tag = 'internal scratch']
  %s0 = inlined_call_operand.hbm [shape: bf16[8,8,32], index: 0, kind: input, shape index: {}]
  %s1 = inlined_call_operand.hbm [shape: bf16[32,32], index: 1, kind: input, shape index: {}]
  %s2 = inlined_call_operand.hbm [shape: bf16[16,128], index: 2, kind: input, shape index: {}]
  %s3 = inlined_call_operand.vmem [shape: f32[1,128], index: 3, kind: input, shape index: {}]
  %s4 = inlined_call_operand.hbm [shape: f32[8,8,128], index: 4, kind: output, shape index: {}]
  %s5 = sld [smem:[#allocation0]]
  $region61: #{tpu_custom_call.1} parent=0
    _
  %s7 = ssub.s32 1, %s5
  %s8 = scalar_select 0, %s7, %s5
  $region1: #{tpu_custom_call.1} parent=0
    #allocation2 [shape = 'u8[16384]{0}', space=vmem, size = 0x4000, scoped, tag = 'input window, operand 0']
    #allocation3 [shape = 's32[2]{0}', space=sflag, size = 0x8, scoped, tag = 'scoped memory for tpu_custom_call.1']
    #allocation4 [shape = 's32[2]{0}', space=sflag, size = 0x8, scoped, tag = 'scoped memory for tpu_custom_call.1']
    #allocation5 [shape = 'u8[8192]{0}', space=vmem, size = 0x2000, scoped, tag = 'input window, operand 1, single buffered']
    #allocation6 [shape = 's32[1]{0}', space=sflag, size = 0x4, scoped, tag = 'scoped memory for tpu_custom_call.1']
    #allocation7 [shape = 'u8[4096]{0}', space=vmem, size = 0x1000, scoped, tag = 'input window, operand 2, single buffered']
    #allocation8 [shape = 'u8[32768]{0}', space=vmem, size = 0x8000, scoped, tag = 'output window, operand 0']
    %9 = vsyncpa [#allocation3], 0
    %s10 = scalar_lea.sflag [#allocation3], 1
    %11 = vsyncpa %s10, 0
    %12 = vsyncpa [#allocation6], 0
    %13 = vsyncpa [#allocation4], 0
    %s14 = scalar_lea.sflag [#allocation4], 1
    %15 = vsyncpa %s14, 0
    loop: start=0, step=1, limit=4
    $region2: #{tpu_custom_call.1} parent=1 // loop_pre_header
      _
    $region3: #{tpu_custom_call.1} parent=1 // loop_header
      %s17 = sphi 0, %s21
      %p18 = scmp.ge.s32.totalorder %s17, 4
      %s27 = sphi 0, %s29
      %s30 = sphi 0, %s27
      %s31 = sphi 0, %s30
      %s47 = sphi 0, %s31
      %s51 = sphi 0, %s51
      %s53 = sphi 0, %s51
      %s54 = sphi 0, %s53
      %s68 = sphi 0, %s54
      %s72 = sphi 0, %s72
      %s74 = sphi 0, %s72
      %s75 = sphi 0, %s74
      %s89 = sphi 0, %s75
      %s93 = sphi 0, %s93
      %s95 = sphi 0, %s93
      %s96 = sphi 0, %s95
      %s110 = sphi 0, %s96
      %s116 = sphi 0, %s118
      %s119 = sphi 0, %s116
      %s120 = sphi 0, %s119
      %s136 = sphi 0, %s120
    $region4: #{tpu_custom_call.1} parent=1 // loop_header_branch
      %20 = sbr.rel (%p18) target = $region8
    $region5: #{tpu_custom_call.1} parent=1 // loop_body
      %s22 = ssub.s32 %s17, 1
      %s23 = ssub.s32 %s17, 2
      %s24 = sadd.s32 %s17, 1
      %s25 = ssub.s32 %s17, %s24
      %p26 = scmp.eq.s32.totalorder %s25, 0
      %s28 = sadd.s32 %s27, 1
      %s29 = scalar_select %p26, %s27, %s28
      %p32 = pneg %p26
      %p33 = scmp.eq.s32.totalorder %s17, 1
      %p34 = por %p32, %p33
      %p35 = scmp.ne.s32.totalorder %s27, %s30
      %p36 = scmp.eq.s32.totalorder %s17, 0
      %p37 = por %p35, %p36
      %p38 = scmp.ne.s32.totalorder %s27, %s30
      %p39 = scmp.eq.s32.totalorder %s22, 1
      %p40 = por %p38, %p39
      %p41 = scmp.ne.s32.totalorder %s30, %s31
      %p42 = scmp.eq.s32.totalorder %s22, 0
      %p43 = por %p41, %p42
      %p44 = scmp.ne.s32.totalorder %s30, %s31
      %p45 = scmp.eq.s32.totalorder %s23, 1
      %p46 = por %p44, %p45
      %p48 = scmp.ne.s32.totalorder %s31, %s47
      %p49 = scmp.eq.s32.totalorder %s23, 0
      %p50 = por %p48, %p49
      %s52 = sadd.s32 %s51, 1
      %p55 = scmp.eq.s32.totalorder %s17, 1
      %p56 = scmp.ne.s32.totalorder %s51, %s53
      %p57 = scmp.eq.s32.totalorder %s17, 0
      %p58 = por %p56, %p57
      %p59 = scmp.ne.s32.totalorder %s51, %s53
      %p60 = scmp.eq.s32.totalorder %s22, 1
      %p61 = por %p59, %p60
      %p62 = scmp.ne.s32.totalorder %s53, %s54
      %p63 = scmp.eq.s32.totalorder %s22, 0
      %p64 = por %p62, %p63
      %p65 = scmp.ne.s32.totalorder %s53, %s54
      %p66 = scmp.eq.s32.totalorder %s23, 1
      %p67 = por %p65, %p66
      %p69 = scmp.ne.s32.totalorder %s54, %s68
      %p70 = scmp.eq.s32.totalorder %s23, 0
      %p71 = por %p69, %p70
      %s73 = sadd.s32 %s72, 1
      %p76 = scmp.eq.s32.totalorder %s17, 1
      %p77 = scmp.ne.s32.totalorder %s72, %s74
      %p78 = scmp.eq.s32.totalorder %s17, 0
      %p79 = por %p77, %p78
      %p80 = scmp.ne.s32.totalorder %s72, %s74
      %p81 = scmp.eq.s32.totalorder %s22, 1
      %p82 = por %p80, %p81
      %p83 = scmp.ne.s32.totalorder %s74, %s75
      %p84 = scmp.eq.s32.totalorder %s22, 0
      %p85 = por %p83, %p84
      %p86 = scmp.ne.s32.totalorder %s74, %s75
      %p87 = scmp.eq.s32.totalorder %s23, 1
      %p88 = por %p86, %p87
      %p90 = scmp.ne.s32.totalorder %s75, %s89
      %p91 = scmp.eq.s32.totalorder %s23, 0
      %p92 = por %p90, %p91
      %s94 = sadd.s32 %s93, 1
      %p97 = scmp.eq.s32.totalorder %s17, 1
      %p98 = scmp.ne.s32.totalorder %s93, %s95
      %p99 = scmp.eq.s32.totalorder %s17, 0
      %p100 = por %p98, %p99
      %p101 = scmp.ne.s32.totalorder %s93, %s95
      %p102 = scmp.eq.s32.totalorder %s22, 1
      %p103 = por %p101, %p102
      %p104 = scmp.ne.s32.totalorder %s95, %s96
      %p105 = scmp.eq.s32.totalorder %s22, 0
      %p106 = por %p104, %p105
      %p107 = scmp.ne.s32.totalorder %s95, %s96
      %p108 = scmp.eq.s32.totalorder %s23, 1
      %p109 = por %p107, %p108
      %p111 = scmp.ne.s32.totalorder %s96, %s110
      %p112 = scmp.eq.s32.totalorder %s23, 0
      %p113 = por %p111, %p112
      %s114 = ssub.s32 %s17, %s24
      %p115 = scmp.eq.s32.totalorder %s114, 0
      %s117 = sadd.s32 %s116, 1
      %s118 = scalar_select %p115, %s116, %s117
      %p121 = pneg %p115
      %p122 = scmp.eq.s32.totalorder %s17, 1
      %p123 = por %p121, %p122
      %p124 = scmp.ne.s32.totalorder %s116, %s119
      %p125 = scmp.eq.s32.totalorder %s17, 0
      %p126 = por %p124, %p125
      %p127 = scmp.ne.s32.totalorder %s116, %s119
      %p128 = scmp.eq.s32.totalorder %s22, 1
      %p129 = por %p127, %p128
      %p130 = scmp.ne.s32.totalorder %s119, %s120
      %p131 = scmp.eq.s32.totalorder %s22, 0
      %p132 = por %p130, %p131
      %p133 = scmp.ne.s32.totalorder %s119, %s120
      %p134 = scmp.eq.s32.totalorder %s23, 1
      %p135 = por %p133, %p134
      %p137 = scmp.ne.s32.totalorder %s120, %s136
      %p138 = scmp.eq.s32.totalorder %s23, 0
      %p139 = por %p137, %p138
      %p140 = scmp.le.s32.totalorder 1, %s17
      %p141 = scmp.lt.s32.totalorder %s17, 3
      %p142 = pnand %p140, %p141
      %p143 = pneg %p142
      // Predicated region
      $region9: #{tpu_custom_call.1} parent=5 // pred_check
        _
      $region10: #{tpu_custom_call.1} parent=5 // pred_check_branch
        %145 = sbr.rel (%p142) target = $region12
      $region11: #{tpu_custom_call.1} parent=5 // pred_region
        %s146 = ssub.s32 %s17, 1
        // Predicated region
        $region13: #{tpu_custom_call.1} parent=11 // pred_check
          %p147 = pneg %p64
        $region14: #{tpu_custom_call.1} parent=11 // pred_check_branch
          %149 = sbr.rel (%p147) target = $region16
        $region15: #{tpu_custom_call.1} parent=11 // pred_region
          %s151 = ssub.s32 256, 256
          %152 = vsyncadd [#allocation6], %s151
          %s153 = sshll.u32 [#allocation5], 4
          %s154 = int_to_ptr.vmem [resolvable:$true] %s153
          %159 = dma.hbm_to_vmem [thread:$0]  %s1, 256, %s154, [#allocation6], 64, 64, 4
        $region16: #{tpu_custom_call.1} parent=11 // pred_fallthru
          _
        // Predicated region
        $region17: #{tpu_custom_call.1} parent=11 // pred_check
          %p160 = pneg %p85
        $region18: #{tpu_custom_call.1} parent=11 // pred_check_branch
          %162 = sbr.rel (%p160) target = $region20
        $region19: #{tpu_custom_call.1} parent=11 // pred_region
          %s164 = ssub.s32 128, 128
          %165 = vsyncadd [#allocation6], %s164
          %s166 = sshll.u32 [#allocation7], 4
          %s167 = int_to_ptr.vmem [resolvable:$true] %s166
          %172 = dma.hbm_to_vmem [thread:$0]  %s2, 128, %s167, [#allocation6], 64, 64, 4
        $region20: #{tpu_custom_call.1} parent=11 // pred_fallthru
          _
        // Predicated region
        $region21: #{tpu_custom_call.1} parent=11 // pred_check
          %p173 = pneg %p106
        $region22: #{tpu_custom_call.1} parent=11 // pred_check_branch
          %175 = sbr.rel (%p173) target = $region24
        $region23: #{tpu_custom_call.1} parent=11 // pred_region
          _
        $region24: #{tpu_custom_call.1} parent=11 // pred_fallthru
          _
      $region12: #{tpu_custom_call.1} parent=5 // pred_fallthru
        _
      %p176 = scmp.lt.s32.totalorder %s17, 2
      // Predicated region
      $region25: #{tpu_custom_call.1} parent=5 // pred_check
        %p177 = pneg %p176
      $region26: #{tpu_custom_call.1} parent=5 // pred_check_branch
        %179 = sbr.rel (%p177) target = $region28
      $region27: #{tpu_custom_call.1} parent=5 // pred_region
        // Predicated region
        $region29: #{tpu_custom_call.1} parent=27 // pred_check
          %p180 = pneg %p37
        $region30: #{tpu_custom_call.1} parent=27 // pred_check_branch
          %182 = sbr.rel (%p180) target = $region32
        $region31: #{tpu_custom_call.1} parent=27 // pred_region
          %s183 = sand.u32 %s27, 1
          %s184 = scalar_lea.sflag [#allocation3], %s183
          %s185 = sand.u32 %s27, 1
          %s186 = smul.addr %s185, 16
          %s187 = scalar_lea.vmem [#allocation2], %s186
          %s188 = smul.u32 4, %s17
          %s190 = ssub.s32 256, 256
          %191 = vsyncadd %s184, %s190
          %s192 = smul.addr %s188, 64
          %s193 = scalar_lea.hbm %s0, %s192
          %s194 = sshll.u32 %s187, 4
          %s195 = int_to_ptr.vmem [resolvable:$true] %s194
          %200 = dma.hbm_to_vmem [thread:$0]  %s193, 256, %s195, %s184, 64, 64, 4
        $region32: #{tpu_custom_call.1} parent=27 // pred_fallthru
          _
      $region28: #{tpu_custom_call.1} parent=5 // pred_fallthru
        _
      %p201 = scmp.le.s32.totalorder 1, %s17
      %p202 = scmp.lt.s32.totalorder %s17, 3
      %p203 = pnand %p201, %p202
      %p204 = pneg %p203
      // Predicated region
      $region33: #{tpu_custom_call.1} parent=5 // pred_check
        _
      $region34: #{tpu_custom_call.1} parent=5 // pred_check_branch
        %206 = sbr.rel (%p203) target = $region36
      $region35: #{tpu_custom_call.1} parent=5 // pred_region
        %s207 = ssub.s32 %s17, 1
        %s208 = sand.u32 %s30, 1
        %s209 = scalar_lea.sflag [#allocation3], %s208
        %s210 = sand.u32 %s30, 1
        %s211 = smul.addr %s210, 16
        %s212 = scalar_lea.vmem [#allocation2], %s211
        // Predicated region
        $region37: #{tpu_custom_call.1} parent=35 // pred_check
          %p213 = pneg %p43
        $region38: #{tpu_custom_call.1} parent=35 // pred_check_branch
          %215 = sbr.rel (%p213) target = $region40
        $region39: #{tpu_custom_call.1} parent=35 // pred_region
          %216 = dma.done %s209, 256
        $region40: #{tpu_custom_call.1} parent=35 // pred_fallthru
          _
        // Predicated region
        $region41: #{tpu_custom_call.1} parent=35 // pred_check
          %p217 = pneg %p64
        $region42: #{tpu_custom_call.1} parent=35 // pred_check_branch
          %219 = sbr.rel (%p217) target = $region44
        $region43: #{tpu_custom_call.1} parent=35 // pred_region
          %220 = dma.done [#allocation6], 256
        $region44: #{tpu_custom_call.1} parent=35 // pred_fallthru
          _
        // Predicated region
        $region45: #{tpu_custom_call.1} parent=35 // pred_check
          %p221 = pneg %p85
        $region46: #{tpu_custom_call.1} parent=35 // pred_check_branch
          %223 = sbr.rel (%p221) target = $region48
        $region47: #{tpu_custom_call.1} parent=35 // pred_region
          %224 = dma.done [#allocation6], 128
        $region48: #{tpu_custom_call.1} parent=35 // pred_fallthru
          _
        %s225 = sand.u32 %s30, 1
        %s226 = scalar_lea.sflag [#allocation3], %s225
        %s227 = sand.u32 %s30, 1
        %s228 = smul.addr %s227, 16
        %s229 = scalar_lea.vmem [#allocation2], %s228
        %p230 = pneg %p43
        %p231 = pneg %p40
        %p232 = pneg %p64
        %p233 = pneg %p61
        %p234 = pneg %p85
        %p235 = pneg %p82
        %p236 = pneg %p106
        %p237 = pneg %p103
        %p238 = pneg %p132
        %p239 = pneg %p129
        %s240 = sand.u32 %s119, 1
        %s241 = scalar_lea.sflag [#allocation4], %s240
        %s242 = sand.u32 %s119, 1
        %s243 = smul.addr %s242, 32
        %s244 = scalar_lea.vmem [#allocation8], %s243
        %s245 = smul.u32 4, %s22
        %s246 = smul.u32 4, %s22
        %v248 = vld [vmem:[%s212] sm:$0xf]
        %v249 = vld [vmem:[%s212 + $0x4] sm:$0xf]
        %v250 = vld [vmem:[%s212 + $0x8] sm:$0xf]
        %v251 = vld [vmem:[%s212 + $0xc] sm:$0xf]
        %v252 = vld [vmem:[#allocation5] sm:$0xf]
        %v253 = vld [vmem:[#allocation5 + $0x4] sm:$0xf]
        %v254 = vld [vmem:[#allocation5 + $0x8] sm:$0xf]
        %v255 = vld [vmem:[#allocation5 + $0xc] sm:$0xf]
        %v260 = vunpack.c.l.b16 %v248
        %v261 = vunpack.c.l.b16 %v249
        %v262 = vunpack.c.l.b16 %v250
        %v263 = vunpack.c.l.b16 %v251
        %v264 = vpack.c.b16 %v261, %v260
        %v265 = vpack.c.b16 %v263, %v262
        %v270 = vunpack.c.l.b16 %v252
        %v271 = vunpack.c.l.b16 %v253
        %v272 = vunpack.c.l.b16 %v254
        %v273 = vunpack.c.l.b16 %v255
        %v274 = vpack.c.b16 %v271, %v270
        %v275 = vpack.c.b16 %v273, %v272
        %vm278 = vcmask 261120
        %v280 = vsel %vm278, %v264, 0
        %v283 = vsel %vm278, %v265, 0
        %285 = vmatprep.subr.bf16.mxu0 0
        %286 = vmatpush1.bf16.msra.mxu0 %v274
        %287 = vmatprep.subr.bf16.mxu0 0
        %288 = vmatpush1.bf16.msra.mxu0 %v275
        %289 = vmatprep.subr.bf16.mxu0 0
        %290 = vmatpush1.bf16.msra.mxu0 0
        %291 = vmatprep.subr.bf16.mxu0 0
        %292 = vmatpush1.bf16.msra.mxu0 0
        %293 = vmatprep.subr.bf16.mxu0 0
        %294 = vmatpush1.bf16.msra.mxu0 0
        %295 = vmatprep.subr.bf16.mxu0 0
        %296 = vmatpush1.bf16.msra.mxu0 0
        %297 = vmatprep.subr.bf16.mxu0 0
        %298 = vmatpush1.bf16.msra.mxu0 0
        %299 = vmatprep.subr.bf16.mxu0 0
        %300 = vmatpush1.bf16.msra.mxu0 0
        %301 = vmatprep.subr.bf16.mxu0 0
        %302 = vmatpush1.bf16.msra.mxu0 0
        %303 = vmatprep.subr.bf16.mxu0 0
        %304 = vmatpush1.bf16.msra.mxu0 0
        %305 = vmatprep.subr.bf16.mxu0 0
        %306 = vmatpush1.bf16.msra.mxu0 0
        %307 = vmatprep.subr.bf16.mxu0 0
        %308 = vmatpush1.bf16.msra.mxu0 0
        %309 = vmatprep.subr.bf16.mxu0 0
        %310 = vmatpush1.bf16.msra.mxu0 0
        %311 = vmatprep.subr.bf16.mxu0 0
        %312 = vmatpush1.bf16.msra.mxu0 0
        %313 = vmatprep.subr.bf16.mxu0 0
        %314 = vmatpush1.bf16.msra.mxu0 0
        %315 = vmatprep.subr.bf16.mxu0 0
        %316 = vmatpush1.bf16.msra.mxu0 0
        %317 = vmatprep.mubr.bf16.mxu0 0
        %318 = vmatmul.mubr.bf16.gmra.mrb[0].mxu0 %v280
        %v319 = vpop.f32.mrb[0].mxu0
        %v320 = vadd.f32 0.0, %v319
        %v321 = vpop.f32.mrb[0].mxu0
        %v322 = vpop.f32.mrb[0].mxu0
        %v323 = vadd.f32 0.0, %v322
        %v324 = vpop.f32.mrb[0].mxu0
        %325 = vmatprep.mubr.bf16.mxu0 0
        %326 = vmatmul.mubr.bf16.gmra.mrb[0].mxu0 %v283
        %v327 = vpop.f32.mrb[0].mxu0
        %v328 = vadd.f32 0.0, %v327
        %v329 = vpop.f32.mrb[0].mxu0
        %v330 = vpop.f32.mrb[0].mxu0
        %v331 = vadd.f32 0.0, %v330
        %v332 = vpop.f32.mrb[0].mxu0
        %333 = vdwg.mxu0
        %vm334 = vcmask 130048
        %v335 = vsel %vm334, %v320, -inf
        %v336 = vrot.slane %v335, 4
        %v337 = vmax.f32 %v335, %v336
        %v338 = vrot.slane %v337, 2
        %v339 = vmax.f32 %v337, %v338
        %v340 = vrot.slane %v339, 1
        %v341 = vmax.f32 %v339, %v340
        %v342 = vsel %vm334, %v323, -inf
        %v343 = vrot.slane %v342, 4
        %v344 = vmax.f32 %v342, %v343
        %v345 = vrot.slane %v344, 2
        %v346 = vmax.f32 %v344, %v345
        %v347 = vrot.slane %v346, 1
        %v348 = vmax.f32 %v346, %v347
        %v349 = vsel %vm334, %v328, -inf
        %v350 = vrot.slane %v349, 4
        %v351 = vmax.f32 %v349, %v350
        %v352 = vrot.slane %v351, 2
        %v353 = vmax.f32 %v351, %v352
        %v354 = vrot.slane %v353, 1
        %v355 = vmax.f32 %v353, %v354
        %v356 = vsel %vm334, %v331, -inf
        %v357 = vrot.slane %v356, 4
        %v358 = vmax.f32 %v356, %v357
        %v359 = vrot.slane %v358, 2
        %v360 = vmax.f32 %v358, %v359
        %v361 = vrot.slane %v360, 1
        %v362 = vmax.f32 %v360, %v361
        %v363 = vsub.f32 %v320, %v341
        %v364 = vsub.f32 %v323, %v348
        %v365 = vsub.f32 %v328, %v355
        %v366 = vsub.f32 %v331, %v362
        %v367 = vmul.f32 %v363, 1.442695
        %v368 = vpow.pop %v367
        %v369 = vmul.f32 %v364, 1.442695
        %v370 = vpow.pop %v369
        %v371 = vmul.f32 %v365, 1.442695
        %v372 = vpow.pop %v371
        %v373 = vmul.f32 %v366, 1.442695
        %v374 = vpow.pop %v373
        %v375 = vsel %vm334, %v368, 0.0
        %v376 = vrot.slane %v375, 4
        %v377 = vadd.f32 %v375, %v376
        %v378 = vrot.slane %v377, 2
        %v379 = vadd.f32 %v377, %v378
        %v380 = vrot.slane %v379, 1
        %v381 = vadd.f32 %v379, %v380
        %v382 = vsel %vm334, %v370, 0.0
        %v383 = vrot.slane %v382, 4
        %v384 = vadd.f32 %v382, %v383
        %v385 = vrot.slane %v384, 2
        %v386 = vadd.f32 %v384, %v385
        %v387 = vrot.slane %v386, 1
        %v388 = vadd.f32 %v386, %v387
        %v389 = vsel %vm334, %v372, 0.0
        %v390 = vrot.slane %v389, 4
        %v391 = vadd.f32 %v389, %v390
        %v392 = vrot.slane %v391, 2
        %v393 = vadd.f32 %v391, %v392
        %v394 = vrot.slane %v393, 1
        %v395 = vadd.f32 %v393, %v394
        %v396 = vsel %vm334, %v374, 0.0
        %v397 = vrot.slane %v396, 4
        %v398 = vadd.f32 %v396, %v397
        %v399 = vrot.slane %v398, 2
        %v400 = vadd.f32 %v398, %v399
        %v401 = vrot.slane %v400, 1
        %v402 = vadd.f32 %v400, %v401
        %v403 = vrcp.pop %v381
        %v404 = vrcp.pop %v388
        %v405 = vrcp.pop %v395
        %v406 = vrcp.pop %v402
        %v407 = vmul.f32 %v368, %v403
        %v408 = vmul.f32 %v370, %v404
        %v409 = vmul.f32 %v372, %v405
        %v410 = vmul.f32 %v374, %v406
        %v411 = vpack.c.bf16 %v407, %v407
        %v412 = vpack.c.bf16 %v408, %v408
        %v413 = vpack.c.bf16 %v409, %v409
        %v414 = vpack.c.bf16 %v410, %v410
        %v415 = vpack.c.bf16 %v320, %v320
        %v416 = vpack.c.bf16 %v323, %v323
        %v417 = vpack.c.bf16 %v328, %v328
        %v418 = vpack.c.bf16 %v331, %v331
        %v419 = vld [vmem:[#allocation7] sm:$0xf]
        %v420 = vld [vmem:[#allocation7 + $0x4] sm:$0xf]
        %421 = vxpose.xlu0.c.b16.start [1/8] %v411, 128
        %422 = vxpose.xlu0.c.b16.cont [2/8] 0, 128
        %423 = vxpose.xlu0.c.b16.cont [3/8] 0, 128
        %424 = vxpose.xlu0.c.b16.cont [4/8] 0, 128
        %425 = vxpose.xlu0.c.b16.cont [5/8] 0, 128
        %426 = vxpose.xlu0.c.b16.cont [6/8] 0, 128
        %427 = vxpose.xlu0.c.b16.cont [7/8] 0, 128
        %428 = vxpose.xlu0.c.b16.end [8/8] 0, 128
        %v429 = vpop.trf.xlu0
        %v430 = vpop.trf.xlu0
        %v431 = vpop.trf.xlu0
        %v432 = vpop.trf.xlu0
        %v433 = vpop.trf.xlu0
        %v434 = vpop.trf.xlu0
        %v435 = vpop.trf.xlu0
        %v436 = vpop.trf.xlu0
        %438 = vrot.lane.b32.xlu0 %v415, 112
        %v439 = vpop.permute.xlu0 %438
        %vm440 = vcmask 64512
        %v442 = vsel %vm440, %v429, 0
        %vm444 = vcmask 1043456
        %v446 = vsel %vm444, %v439, 0
        %448 = vmatprep.subr.bf16.mxu0 0
        %449 = vmatpush1.bf16.msra.mxu0 %v446
        %450 = vmatprep.subr.bf16.mxu0 0
        %451 = vmatpush1.bf16.msra.mxu0 0
        %452 = vmatprep.subr.bf16.mxu0 0
        %453 = vmatpush1.bf16.msra.mxu0 0
        %454 = vmatprep.subr.bf16.mxu0 0
        %455 = vmatpush1.bf16.msra.mxu0 0
        %456 = vmatprep.subr.bf16.mxu0 0
        %457 = vmatpush1.bf16.msra.mxu0 0
        %458 = vmatprep.subr.bf16.mxu0 0
        %459 = vmatpush1.bf16.msra.mxu0 0
        %460 = vmatprep.subr.bf16.mxu0 0
        %461 = vmatpush1.bf16.msra.mxu0 0
        %462 = vmatprep.subr.bf16.mxu0 0
        %463 = vmatpush1.bf16.msra.mxu0 0
        %464 = vmatprep.subr.bf16.mxu0 0
        %465 = vmatpush1.bf16.msra.mxu0 0
        %466 = vmatprep.subr.bf16.mxu0 0
        %467 = vmatpush1.bf16.msra.mxu0 0
        %468 = vmatprep.subr.bf16.mxu0 0
        %469 = vmatpush1.bf16.msra.mxu0 0
        %470 = vmatprep.subr.bf16.mxu0 0
        %471 = vmatpush1.bf16.msra.mxu0 0
        %472 = vmatprep.subr.bf16.mxu0 0
        %473 = vmatpush1.bf16.msra.mxu0 0
        %474 = vmatprep.subr.bf16.mxu0 0
        %475 = vmatpush1.bf16.msra.mxu0 0
        %476 = vmatprep.subr.bf16.mxu0 0
        %477 = vmatpush1.bf16.msra.mxu0 0
        %478 = vmatprep.subr.bf16.mxu0 0
        %479 = vmatpush1.bf16.msra.mxu0 0
        %480 = vmatprep.mubr.bf16.mxu0 0
        %481 = vmatmul.mubr.bf16.gmra.mrb[0].mxu0 %v442
        %v482 = vpop.f32.mrb[0].mxu0
        %v483 = vadd.f32 0.0, %v482
        %v484 = vpop.f32.mrb[0].mxu0
        %v485 = vpop.f32.mrb[0].mxu0
        %v486 = vpop.f32.mrb[0].mxu0
        %487 = vdwg.mxu0
        %488 = vxpose.xlu0.c.b16.start [1/8] %v412, 128
        %489 = vxpose.xlu0.c.b16.cont [2/8] 0, 128
        %490 = vxpose.xlu0.c.b16.cont [3/8] 0, 128
        %491 = vxpose.xlu0.c.b16.cont [4/8] 0, 128
        %492 = vxpose.xlu0.c.b16.cont [5/8] 0, 128
        %493 = vxpose.xlu0.c.b16.cont [6/8] 0, 128
        %494 = vxpose.xlu0.c.b16.cont [7/8] 0, 128
        %495 = vxpose.xlu0.c.b16.end [8/8] 0, 128
        %v496 = vpop.trf.xlu0
        %v497 = vpop.trf.xlu0
        %v498 = vpop.trf.xlu0
        %v499 = vpop.trf.xlu0
        %v500 = vpop.trf.xlu0
        %v501 = vpop.trf.xlu0
        %v502 = vpop.trf.xlu0
        %v503 = vpop.trf.xlu0
        %505 = vrot.lane.b32.xlu0 %v416, 112
        %v506 = vpop.permute.xlu0 %505
        %v508 = vsel %vm440, %v496, 0
        %v511 = vsel %vm444, %v506, 0
        %513 = vmatprep.subr.bf16.mxu0 0
        %514 = vmatpush1.bf16.msra.mxu0 %v511
        %515 = vmatprep.subr.bf16.mxu0 0
        %516 = vmatpush1.bf16.msra.mxu0 0
        %517 = vmatprep.subr.bf16.mxu0 0
        %518 = vmatpush1.bf16.msra.mxu0 0
        %519 = vmatprep.subr.bf16.mxu0 0
        %520 = vmatpush1.bf16.msra.mxu0 0
        %521 = vmatprep.subr.bf16.mxu0 0
        %522 = vmatpush1.bf16.msra.mxu0 0
        %523 = vmatprep.subr.bf16.mxu0 0
        %524 = vmatpush1.bf16.msra.mxu0 0
        %525 = vmatprep.subr.bf16.mxu0 0
        %526 = vmatpush1.bf16.msra.mxu0 0
        %527 = vmatprep.subr.bf16.mxu0 0
        %528 = vmatpush1.bf16.msra.mxu0 0
        %529 = vmatprep.subr.bf16.mxu0 0
        %530 = vmatpush1.bf16.msra.mxu0 0
        %531 = vmatprep.subr.bf16.mxu0 0
        %532 = vmatpush1.bf16.msra.mxu0 0
        %533 = vmatprep.subr.bf16.mxu0 0
        %534 = vmatpush1.bf16.msra.mxu0 0
        %535 = vmatprep.subr.bf16.mxu0 0
        %536 = vmatpush1.bf16.msra.mxu0 0
        %537 = vmatprep.subr.bf16.mxu0 0
        %538 = vmatpush1.bf16.msra.mxu0 0
        %539 = vmatprep.subr.bf16.mxu0 0
        %540 = vmatpush1.bf16.msra.mxu0 0
        %541 = vmatprep.subr.bf16.mxu0 0
        %542 = vmatpush1.bf16.msra.mxu0 0
        %543 = vmatprep.subr.bf16.mxu0 0
        %544 = vmatpush1.bf16.msra.mxu0 0
        %545 = vmatprep.mubr.bf16.mxu0 0
        %546 = vmatmul.mubr.bf16.gmra.mrb[0].mxu0 %v508
        %v547 = vpop.f32.mrb[0].mxu0
        %v548 = vadd.f32 0.0, %v547
        %v549 = vpop.f32.mrb[0].mxu0
        %v550 = vpop.f32.mrb[0].mxu0
        %v551 = vpop.f32.mrb[0].mxu0
        %552 = vdwg.mxu0
        %553 = vxpose.xlu0.c.b16.start [1/8] %v413, 128
        %554 = vxpose.xlu0.c.b16.cont [2/8] 0, 128
        %555 = vxpose.xlu0.c.b16.cont [3/8] 0, 128
        %556 = vxpose.xlu0.c.b16.cont [4/8] 0, 128
        %557 = vxpose.xlu0.c.b16.cont [5/8] 0, 128
        %558 = vxpose.xlu0.c.b16.cont [6/8] 0, 128
        %559 = vxpose.xlu0.c.b16.cont [7/8] 0, 128
        %560 = vxpose.xlu0.c.b16.end [8/8] 0, 128
        %v561 = vpop.trf.xlu0
        %v562 = vpop.trf.xlu0
        %v563 = vpop.trf.xlu0
        %v564 = vpop.trf.xlu0
        %v565 = vpop.trf.xlu0
        %v566 = vpop.trf.xlu0
        %v567 = vpop.trf.xlu0
        %v568 = vpop.trf.xlu0
        %570 = vrot.lane.b32.xlu0 %v417, 112
        %v571 = vpop.permute.xlu0 %570
        %v573 = vsel %vm440, %v561, 0
        %v576 = vsel %vm444, %v571, 0
        %578 = vmatprep.subr.bf16.mxu0 0
        %579 = vmatpush1.bf16.msra.mxu0 %v576
        %580 = vmatprep.subr.bf16.mxu0 0
        %581 = vmatpush1.bf16.msra.mxu0 0
        %582 = vmatprep.subr.bf16.mxu0 0
        %583 = vmatpush1.bf16.msra.mxu0 0
        %584 = vmatprep.subr.bf16.mxu0 0
        %585 = vmatpush1.bf16.msra.mxu0 0
        %586 = vmatprep.subr.bf16.mxu0 0
        %587 = vmatpush1.bf16.msra.mxu0 0
        %588 = vmatprep.subr.bf16.mxu0 0
        %589 = vmatpush1.bf16.msra.mxu0 0
        %590 = vmatprep.subr.bf16.mxu0 0
        %591 = vmatpush1.bf16.msra.mxu0 0
        %592 = vmatprep.subr.bf16.mxu0 0
        %593 = vmatpush1.bf16.msra.mxu0 0
        %594 = vmatprep.subr.bf16.mxu0 0
        %595 = vmatpush1.bf16.msra.mxu0 0
        %596 = vmatprep.subr.bf16.mxu0 0
        %597 = vmatpush1.bf16.msra.mxu0 0
        %598 = vmatprep.subr.bf16.mxu0 0
        %599 = vmatpush1.bf16.msra.mxu0 0
        %600 = vmatprep.subr.bf16.mxu0 0
        %601 = vmatpush1.bf16.msra.mxu0 0
        %602 = vmatprep.subr.bf16.mxu0 0
        %603 = vmatpush1.bf16.msra.mxu0 0
        %604 = vmatprep.subr.bf16.mxu0 0
        %605 = vmatpush1.bf16.msra.mxu0 0
        %606 = vmatprep.subr.bf16.mxu0 0
        %607 = vmatpush1.bf16.msra.mxu0 0
        %608 = vmatprep.subr.bf16.mxu0 0
        %609 = vmatpush1.bf16.msra.mxu0 0
        %610 = vmatprep.mubr.bf16.mxu0 0
        %611 = vmatmul.mubr.bf16.gmra.mrb[0].mxu0 %v573
        %v612 = vpop.f32.mrb[0].mxu0
        %v613 = vadd.f32 0.0, %v612
        %v614 = vpop.f32.mrb[0].mxu0
        %v615 = vpop.f32.mrb[0].mxu0
        %v616 = vpop.f32.mrb[0].mxu0
        %617 = vdwg.mxu0
        %618 = vxpose.xlu0.c.b16.start [1/8] %v414, 128
        %619 = vxpose.xlu0.c.b16.cont [2/8] 0, 128
        %620 = vxpose.xlu0.c.b16.cont [3/8] 0, 128
        %621 = vxpose.xlu0.c.b16.cont [4/8] 0, 128
        %622 = vxpose.xlu0.c.b16.cont [5/8] 0, 128
        %623 = vxpose.xlu0.c.b16.cont [6/8] 0, 128
        %624 = vxpose.xlu0.c.b16.cont [7/8] 0, 128
        %625 = vxpose.xlu0.c.b16.end [8/8] 0, 128
        %v626 = vpop.trf.xlu0
        %v627 = vpop.trf.xlu0
        %v628 = vpop.trf.xlu0
        %v629 = vpop.trf.xlu0
        %v630 = vpop.trf.xlu0
        %v631 = vpop.trf.xlu0
        %v632 = vpop.trf.xlu0
        %v633 = vpop.trf.xlu0
        %635 = vrot.lane.b32.xlu0 %v418, 112
        %v636 = vpop.permute.xlu0 %635
        %v638 = vsel %vm440, %v626, 0
        %v641 = vsel %vm444, %v636, 0
        %643 = vmatprep.subr.bf16.mxu0 0
        %644 = vmatpush1.bf16.msra.mxu0 %v641
        %645 = vmatprep.subr.bf16.mxu0 0
        %646 = vmatpush1.bf16.msra.mxu0 0
        %647 = vmatprep.subr.bf16.mxu0 0
        %648 = vmatpush1.bf16.msra.mxu0 0
        %649 = vmatprep.subr.bf16.mxu0 0
        %650 = vmatpush1.bf16.msra.mxu0 0
        %651 = vmatprep.subr.bf16.mxu0 0
        %652 = vmatpush1.bf16.msra.mxu0 0
        %653 = vmatprep.subr.bf16.mxu0 0
        %654 = vmatpush1.bf16.msra.mxu0 0
        %655 = vmatprep.subr.bf16.mxu0 0
        %656 = vmatpush1.bf16.msra.mxu0 0
        %657 = vmatprep.subr.bf16.mxu0 0
        %658 = vmatpush1.bf16.msra.mxu0 0
        %659 = vmatprep.subr.bf16.mxu0 0
        %660 = vmatpush1.bf16.msra.mxu0 0
        %661 = vmatprep.subr.bf16.mxu0 0
        %662 = vmatpush1.bf16.msra.mxu0 0
        %663 = vmatprep.subr.bf16.mxu0 0
        %664 = vmatpush1.bf16.msra.mxu0 0
        %665 = vmatprep.subr.bf16.mxu0 0
        %666 = vmatpush1.bf16.msra.mxu0 0
        %667 = vmatprep.subr.bf16.mxu0 0
        %668 = vmatpush1.bf16.msra.mxu0 0
        %669 = vmatprep.subr.bf16.mxu0 0
        %670 = vmatpush1.bf16.msra.mxu0 0
        %671 = vmatprep.subr.bf16.mxu0 0
        %672 = vmatpush1.bf16.msra.mxu0 0
        %673 = vmatprep.subr.bf16.mxu0 0
        %674 = vmatpush1.bf16.msra.mxu0 0
        %675 = vmatprep.mubr.bf16.mxu0 0
        %676 = vmatmul.mubr.bf16.gmra.mrb[0].mxu0 %v638
        %v677 = vpop.f32.mrb[0].mxu0
        %v678 = vadd.f32 0.0, %v677
        %v679 = vpop.f32.mrb[0].mxu0
        %v680 = vpop.f32.mrb[0].mxu0
        %v681 = vpop.f32.mrb[0].mxu0
        %682 = vdwg.mxu0
        %v683 = vpack.c.bf16 %v483, %v483
        %v684 = vpack.c.bf16 %v548, %v548
        %v685 = vpack.c.bf16 %v613, %v613
        %v686 = vpack.c.bf16 %v678, %v678
        %688 = vrot.lane.b32.xlu0 %v411, 120
        %v689 = vpop.permute.xlu0 %688
        %691 = vxpose.xlu0.c.b16.start [1/8] %v689, 128
        %692 = vxpose.xlu0.c.b16.cont [2/8] 0, 128
        %693 = vxpose.xlu0.c.b16.cont [3/8] 0, 128
        %694 = vxpose.xlu0.c.b16.cont [4/8] 0, 128
        %695 = vxpose.xlu0.c.b16.cont [5/8] 0, 128
        %696 = vxpose.xlu0.c.b16.cont [6/8] 0, 128
        %697 = vxpose.xlu0.c.b16.cont [7/8] 0, 128
        %698 = vxpose.xlu0.c.b16.end [8/8] 0, 128
        %v699 = vpop.trf.xlu0
        %v700 = vpop.trf.xlu0
        %v701 = vpop.trf.xlu0
        %v702 = vpop.trf.xlu0
        %v703 = vpop.trf.xlu0
        %v704 = vpop.trf.xlu0
        %v705 = vpop.trf.xlu0
        %v706 = vpop.trf.xlu0
        %707 = vrot.lane.b32.xlu0 %v415, 104
        %v708 = vpop.permute.xlu0 %707
        %v710 = vsel %vm440, %v699, 0
        %v713 = vsel %vm444, %v708, 0
        %715 = vmatprep.subr.bf16.mxu0 0
        %716 = vmatpush1.bf16.msra.mxu0 %v713
        %717 = vmatprep.subr.bf16.mxu0 0
        %718 = vmatpush1.bf16.msra.mxu0 0
        %719 = vmatprep.subr.bf16.mxu0 0
        %720 = vmatpush1.bf16.msra.mxu0 0
        %721 = vmatprep.subr.bf16.mxu0 0
        %722 = vmatpush1.bf16.msra.mxu0 0
        %723 = vmatprep.subr.bf16.mxu0 0
        %724 = vmatpush1.bf16.msra.mxu0 0
        %725 = vmatprep.subr.bf16.mxu0 0
        %726 = vmatpush1.bf16.msra.mxu0 0
        %727 = vmatprep.subr.bf16.mxu0 0
        %728 = vmatpush1.bf16.msra.mxu0 0
        %729 = vmatprep.subr.bf16.mxu0 0
        %730 = vmatpush1.bf16.msra.mxu0 0
        %731 = vmatprep.subr.bf16.mxu0 0
        %732 = vmatpush1.bf16.msra.mxu0 0
        %733 = vmatprep.subr.bf16.mxu0 0
        %734 = vmatpush1.bf16.msra.mxu0 0
        %735 = vmatprep.subr.bf16.mxu0 0
        %736 = vmatpush1.bf16.msra.mxu0 0
        %737 = vmatprep.subr.bf16.mxu0 0
        %738 = vmatpush1.bf16.msra.mxu0 0
        %739 = vmatprep.subr.bf16.mxu0 0
        %740 = vmatpush1.bf16.msra.mxu0 0
        %741 = vmatprep.subr.bf16.mxu0 0
        %742 = vmatpush1.bf16.msra.mxu0 0
        %743 = vmatprep.subr.bf16.mxu0 0
        %744 = vmatpush1.bf16.msra.mxu0 0
        %745 = vmatprep.subr.bf16.mxu0 0
        %746 = vmatpush1.bf16.msra.mxu0 0
        %747 = vmatprep.mubr.bf16.mxu0 0
        %748 = vmatmul.mubr.bf16.gmra.mrb[0].mxu0 %v710
        %v749 = vpop.f32.mrb[0].mxu0
        %v750 = vadd.f32 0.0, %v749
        %v751 = vpop.f32.mrb[0].mxu0
        %v752 = vpop.f32.mrb[0].mxu0
        %v753 = vpop.f32.mrb[0].mxu0
        %754 = vdwg.mxu0
        %756 = vrot.lane.b32.xlu0 %v412, 120
        %v757 = vpop.permute.xlu0 %756
        %759 = vxpose.xlu0.c.b16.start [1/8] %v757, 128
        %760 = vxpose.xlu0.c.b16.cont [2/8] 0, 128
        %761 = vxpose.xlu0.c.b16.cont [3/8] 0, 128
        %762 = vxpose.xlu0.c.b16.cont [4/8] 0, 128
        %763 = vxpose.xlu0.c.b16.cont [5/8] 0, 128
        %764 = vxpose.xlu0.c.b16.cont [6/8] 0, 128
        %765 = vxpose.xlu0.c.b16.cont [7/8] 0, 128
        %766 = vxpose.xlu0.c.b16.end [8/8] 0, 128
        %v767 = vpop.trf.xlu0
        %v768 = vpop.trf.xlu0
        %v769 = vpop.trf.xlu0
        %v770 = vpop.trf.xlu0
        %v771 = vpop.trf.xlu0
        %v772 = vpop.trf.xlu0
        %v773 = vpop.trf.xlu0
        %v774 = vpop.trf.xlu0
        %775 = vrot.lane.b32.xlu0 %v416, 104
        %v776 = vpop.permute.xlu0 %775
        %v778 = vsel %vm440, %v767, 0
        %v781 = vsel %vm444, %v776, 0
        %783 = vmatprep.subr.bf16.mxu0 0
        %784 = vmatpush1.bf16.msra.mxu0 %v781
        %785 = vmatprep.subr.bf16.mxu0 0
        %786 = vmatpush1.bf16.msra.mxu0 0
        %787 = vmatprep.subr.bf16.mxu0 0
        %788 = vmatpush1.bf16.msra.mxu0 0
        %789 = vmatprep.subr.bf16.mxu0 0
        %790 = vmatpush1.bf16.msra.mxu0 0
        %791 = vmatprep.subr.bf16.mxu0 0
        %792 = vmatpush1.bf16.msra.mxu0 0
        %793 = vmatprep.subr.bf16.mxu0 0
        %794 = vmatpush1.bf16.msra.mxu0 0
        %795 = vmatprep.subr.bf16.mxu0 0
        %796 = vmatpush1.bf16.msra.mxu0 0
        %797 = vmatprep.subr.bf16.mxu0 0
        %798 = vmatpush1.bf16.msra.mxu0 0
        %799 = vmatprep.subr.bf16.mxu0 0
        %800 = vmatpush1.bf16.msra.mxu0 0
        %801 = vmatprep.subr.bf16.mxu0 0
        %802 = vmatpush1.bf16.msra.mxu0 0
        %803 = vmatprep.subr.bf16.mxu0 0
        %804 = vmatpush1.bf16.msra.mxu0 0
        %805 = vmatprep.subr.bf16.mxu0 0
        %806 = vmatpush1.bf16.msra.mxu0 0
        %807 = vmatprep.subr.bf16.mxu0 0
        %808 = vmatpush1.bf16.msra.mxu0 0
        %809 = vmatprep.subr.bf16.mxu0 0
        %810 = vmatpush1.bf16.msra.mxu0 0
        %811 = vmatprep.subr.bf16.mxu0 0
        %812 = vmatpush1.bf16.msra.mxu0 0
        %813 = vmatprep.subr.bf16.mxu0 0
        %814 = vmatpush1.bf16.msra.mxu0 0
        %815 = vmatprep.mubr.bf16.mxu0 0
        %816 = vmatmul.mubr.bf16.gmra.mrb[0].mxu0 %v778
        %v817 = vpop.f32.mrb[0].mxu0
        %v818 = vadd.f32 0.0, %v817
        %v819 = vpop.f32.mrb[0].mxu0
        %v820 = vpop.f32.mrb[0].mxu0
        %v821 = vpop.f32.mrb[0].mxu0
        %822 = vdwg.mxu0
        %824 = vrot.lane.b32.xlu0 %v413, 120
        %v825 = vpop.permute.xlu0 %824
        %827 = vxpose.xlu0.c.b16.start [1/8] %v825, 128
        %828 = vxpose.xlu0.c.b16.cont [2/8] 0, 128
        %829 = vxpose.xlu0.c.b16.cont [3/8] 0, 128
        %830 = vxpose.xlu0.c.b16.cont [4/8] 0, 128
        %831 = vxpose.xlu0.c.b16.cont [5/8] 0, 128
        %832 = vxpose.xlu0.c.b16.cont [6/8] 0, 128
        %833 = vxpose.xlu0.c.b16.cont [7/8] 0, 128
        %834 = vxpose.xlu0.c.b16.end [8/8] 0, 128
        %v835 = vpop.trf.xlu0
        %v836 = vpop.trf.xlu0
        %v837 = vpop.trf.xlu0
        %v838 = vpop.trf.xlu0
        %v839 = vpop.trf.xlu0
        %v840 = vpop.trf.xlu0
        %v841 = vpop.trf.xlu0
        %v842 = vpop.trf.xlu0
        %843 = vrot.lane.b32.xlu0 %v417, 104
        %v844 = vpop.permute.xlu0 %843
        %v846 = vsel %vm440, %v835, 0
        %v849 = vsel %vm444, %v844, 0
        %851 = vmatprep.subr.bf16.mxu0 0
        %852 = vmatpush1.bf16.msra.mxu0 %v849
        %853 = vmatprep.subr.bf16.mxu0 0
        %854 = vmatpush1.bf16.msra.mxu0 0
        %855 = vmatprep.subr.bf16.mxu0 0
        %856 = vmatpush1.bf16.msra.mxu0 0
        %857 = vmatprep.subr.bf16.mxu0 0
        %858 = vmatpush1.bf16.msra.mxu0 0
        %859 = vmatprep.subr.bf16.mxu0 0
        %860 = vmatpush1.bf16.msra.mxu0 0
        %861 = vmatprep.subr.bf16.mxu0 0
        %862 = vmatpush1.bf16.msra.mxu0 0
        %863 = vmatprep.subr.bf16.mxu0 0
        %864 = vmatpush1.bf16.msra.mxu0 0
        %865 = vmatprep.subr.bf16.mxu0 0
        %866 = vmatpush1.bf16.msra.mxu0 0
        %867 = vmatprep.subr.bf16.mxu0 0
        %868 = vmatpush1.bf16.msra.mxu0 0
        %869 = vmatprep.subr.bf16.mxu0 0
        %870 = vmatpush1.bf16.msra.mxu0 0
        %871 = vmatprep.subr.bf16.mxu0 0
        %872 = vmatpush1.bf16.msra.mxu0 0
        %873 = vmatprep.subr.bf16.mxu0 0
        %874 = vmatpush1.bf16.msra.mxu0 0
        %875 = vmatprep.subr.bf16.mxu0 0
        %876 = vmatpush1.bf16.msra.mxu0 0
        %877 = vmatprep.subr.bf16.mxu0 0
        %878 = vmatpush1.bf16.msra.mxu0 0
        %879 = vmatprep.subr.bf16.mxu0 0
        %880 = vmatpush1.bf16.msra.mxu0 0
        %881 = vmatprep.subr.bf16.mxu0 0
        %882 = vmatpush1.bf16.msra.mxu0 0
        %883 = vmatprep.mubr.bf16.mxu0 0
        %884 = vmatmul.mubr.bf16.gmra.mrb[0].mxu0 %v846
        %v885 = vpop.f32.mrb[0].mxu0
        %v886 = vadd.f32 0.0, %v885
        %v887 = vpop.f32.mrb[0].mxu0
        %v888 = vpop.f32.mrb[0].mxu0
        %v889 = vpop.f32.mrb[0].mxu0
        %890 = vdwg.mxu0
        %892 = vrot.lane.b32.xlu0 %v414, 120
        %v893 = vpop.permute.xlu0 %892
        %895 = vxpose.xlu0.c.b16.start [1/8] %v893, 128
        %896 = vxpose.xlu0.c.b16.cont [2/8] 0, 128
        %897 = vxpose.xlu0.c.b16.cont [3/8] 0, 128
        %898 = vxpose.xlu0.c.b16.cont [4/8] 0, 128
        %899 = vxpose.xlu0.c.b16.cont [5/8] 0, 128
        %900 = vxpose.xlu0.c.b16.cont [6/8] 0, 128
        %901 = vxpose.xlu0.c.b16.cont [7/8] 0, 128
        %902 = vxpose.xlu0.c.b16.end [8/8] 0, 128
        %v903 = vpop.trf.xlu0
        %v904 = vpop.trf.xlu0
        %v905 = vpop.trf.xlu0
        %v906 = vpop.trf.xlu0
        %v907 = vpop.trf.xlu0
        %v908 = vpop.trf.xlu0
        %v909 = vpop.trf.xlu0
        %v910 = vpop.trf.xlu0
        %911 = vrot.lane.b32.xlu0 %v418, 104
        %v912 = vpop.permute.xlu0 %911
        %v914 = vsel %vm440, %v903, 0
        %v917 = vsel %vm444, %v912, 0
        %919 = vmatprep.subr.bf16.mxu0 0
        %920 = vmatpush1.bf16.msra.mxu0 %v917
        %921 = vmatprep.subr.bf16.mxu0 0
        %922 = vmatpush1.bf16.msra.mxu0 0
        %923 = vmatprep.subr.bf16.mxu0 0
        %924 = vmatpush1.bf16.msra.mxu0 0
        %925 = vmatprep.subr.bf16.mxu0 0
        %926 = vmatpush1.bf16.msra.mxu0 0
        %927 = vmatprep.subr.bf16.mxu0 0
        %928 = vmatpush1.bf16.msra.mxu0 0
        %929 = vmatprep.subr.bf16.mxu0 0
        %930 = vmatpush1.bf16.msra.mxu0 0
        %931 = vmatprep.subr.bf16.mxu0 0
        %932 = vmatpush1.bf16.msra.mxu0 0
        %933 = vmatprep.subr.bf16.mxu0 0
        %934 = vmatpush1.bf16.msra.mxu0 0
        %935 = vmatprep.subr.bf16.mxu0 0
        %936 = vmatpush1.bf16.msra.mxu0 0
        %937 = vmatprep.subr.bf16.mxu0 0
        %938 = vmatpush1.bf16.msra.mxu0 0
        %939 = vmatprep.subr.bf16.mxu0 0
        %940 = vmatpush1.bf16.msra.mxu0 0
        %941 = vmatprep.subr.bf16.mxu0 0
        %942 = vmatpush1.bf16.msra.mxu0 0
        %943 = vmatprep.subr.bf16.mxu0 0
        %944 = vmatpush1.bf16.msra.mxu0 0
        %945 = vmatprep.subr.bf16.mxu0 0
        %946 = vmatpush1.bf16.msra.mxu0 0
        %947 = vmatprep.subr.bf16.mxu0 0
        %948 = vmatpush1.bf16.msra.mxu0 0
        %949 = vmatprep.subr.bf16.mxu0 0
        %950 = vmatpush1.bf16.msra.mxu0 0
        %951 = vmatprep.mubr.bf16.mxu0 0
        %952 = vmatmul.mubr.bf16.gmra.mrb[0].mxu0 %v914
        %v953 = vpop.f32.mrb[0].mxu0
        %v954 = vadd.f32 0.0, %v953
        %v955 = vpop.f32.mrb[0].mxu0
        %v956 = vpop.f32.mrb[0].mxu0
        %v957 = vpop.f32.mrb[0].mxu0
        %958 = vdwg.mxu0
        %v959 = vpack.c.bf16 %v750, %v750
        %v960 = vpack.c.bf16 %v818, %v818
        %v961 = vpack.c.bf16 %v886, %v886
        %v962 = vpack.c.bf16 %v954, %v954
        %v967 = vunpack.c.l.b16 %v959
        %v968 = vunpack.c.l.b16 %v960
        %v969 = vunpack.c.l.b16 %v961
        %v970 = vunpack.c.l.b16 %v962
        %v971 = vpack.c.b16 %v968, %v967
        %v972 = vpack.c.b16 %v970, %v969
        %v974 = vsel %vm440, %v971, 0
        %v977 = vsel %vm440, %v972, 0
        %v980 = vsel %vm444, %v420, 0
        %982 = vmatprep.subr.bf16.mxu0 0
        %983 = vmatpush1.bf16.msra.mxu0 %v980
        %984 = vmatprep.subr.bf16.mxu0 0
        %985 = vmatpush1.bf16.msra.mxu0 0
        %986 = vmatprep.subr.bf16.mxu0 0
        %987 = vmatpush1.bf16.msra.mxu0 0
        %988 = vmatprep.subr.bf16.mxu0 0
        %989 = vmatpush1.bf16.msra.mxu0 0
        %990 = vmatprep.subr.bf16.mxu0 0
        %991 = vmatpush1.bf16.msra.mxu0 0
        %992 = vmatprep.subr.bf16.mxu0 0
        %993 = vmatpush1.bf16.msra.mxu0 0
        %994 = vmatprep.subr.bf16.mxu0 0
        %995 = vmatpush1.bf16.msra.mxu0 0
        %996 = vmatprep.subr.bf16.mxu0 0
        %997 = vmatpush1.bf16.msra.mxu0 0
        %998 = vmatprep.subr.bf16.mxu0 0
        %999 = vmatpush1.bf16.msra.mxu0 0
        %1000 = vmatprep.subr.bf16.mxu0 0
        %1001 = vmatpush1.bf16.msra.mxu0 0
        %1002 = vmatprep.subr.bf16.mxu0 0
        %1003 = vmatpush1.bf16.msra.mxu0 0
        %1004 = vmatprep.subr.bf16.mxu0 0
        %1005 = vmatpush1.bf16.msra.mxu0 0
        %1006 = vmatprep.subr.bf16.mxu0 0
        %1007 = vmatpush1.bf16.msra.mxu0 0
        %1008 = vmatprep.subr.bf16.mxu0 0
        %1009 = vmatpush1.bf16.msra.mxu0 0
        %1010 = vmatprep.subr.bf16.mxu0 0
        %1011 = vmatpush1.bf16.msra.mxu0 0
        %1012 = vmatprep.subr.bf16.mxu0 0
        %1013 = vmatpush1.bf16.msra.mxu0 0
        %1014 = vmatprep.mubr.bf16.mxu0 0
        %1015 = vmatmul.mubr.bf16.gmra.mrb[0].mxu0 %v974
        %v1016 = vpop.f32.mrb[0].mxu0
        %v1017 = vadd.f32 0.0, %v1016
        %v1018 = vpop.f32.mrb[0].mxu0
        %v1019 = vpop.f32.mrb[0].mxu0
        %v1020 = vadd.f32 0.0, %v1019
        %v1021 = vpop.f32.mrb[0].mxu0
        %1022 = vmatprep.mubr.bf16.mxu0 0
        %1023 = vmatmul.mubr.bf16.gmra.mrb[0].mxu0 %v977
        %v1024 = vpop.f32.mrb[0].mxu0
        %v1025 = vadd.f32 0.0, %v1024
        %v1026 = vpop.f32.mrb[0].mxu0
        %v1027 = vpop.f32.mrb[0].mxu0
        %v1028 = vadd.f32 0.0, %v1027
        %v1029 = vpop.f32.mrb[0].mxu0
        %1030 = vdwg.mxu0
        %v1035 = vunpack.c.l.b16 %v683
        %v1036 = vunpack.c.l.b16 %v684
        %v1037 = vunpack.c.l.b16 %v685
        %v1038 = vunpack.c.l.b16 %v686
        %v1039 = vpack.c.b16 %v1036, %v1035
        %v1040 = vpack.c.b16 %v1038, %v1037
        %v1042 = vsel %vm440, %v1039, 0
        %v1045 = vsel %vm440, %v1040, 0
        %v1048 = vsel %vm444, %v419, 0
        %1050 = vmatprep.subr.bf16.mxu0 0
        %1051 = vmatpush1.bf16.msra.mxu0 %v1048
        %1052 = vmatprep.subr.bf16.mxu0 0
        %1053 = vmatpush1.bf16.msra.mxu0 0
        %1054 = vmatprep.subr.bf16.mxu0 0
        %1055 = vmatpush1.bf16.msra.mxu0 0
        %1056 = vmatprep.subr.bf16.mxu0 0
        %1057 = vmatpush1.bf16.msra.mxu0 0
        %1058 = vmatprep.subr.bf16.mxu0 0
        %1059 = vmatpush1.bf16.msra.mxu0 0
        %1060 = vmatprep.subr.bf16.mxu0 0
        %1061 = vmatpush1.bf16.msra.mxu0 0
        %1062 = vmatprep.subr.bf16.mxu0 0
        %1063 = vmatpush1.bf16.msra.mxu0 0
        %1064 = vmatprep.subr.bf16.mxu0 0
        %1065 = vmatpush1.bf16.msra.mxu0 0
        %1066 = vmatprep.subr.bf16.mxu0 0
        %1067 = vmatpush1.bf16.msra.mxu0 0
        %1068 = vmatprep.subr.bf16.mxu0 0
        %1069 = vmatpush1.bf16.msra.mxu0 0
        %1070 = vmatprep.subr.bf16.mxu0 0
        %1071 = vmatpush1.bf16.msra.mxu0 0
        %1072 = vmatprep.subr.bf16.mxu0 0
        %1073 = vmatpush1.bf16.msra.mxu0 0
        %1074 = vmatprep.subr.bf16.mxu0 0
        %1075 = vmatpush1.bf16.msra.mxu0 0
        %1076 = vmatprep.subr.bf16.mxu0 0
        %1077 = vmatpush1.bf16.msra.mxu0 0
        %1078 = vmatprep.subr.bf16.mxu0 0
        %1079 = vmatpush1.bf16.msra.mxu0 0
        %1080 = vmatprep.subr.bf16.mxu0 0
        %1081 = vmatpush1.bf16.msra.mxu0 0
        %1082 = vmatprep.mubr.bf16.mxu0 0
        %1083 = vmatmul.mubr.bf16.gmra.mrb[0].mxu0 %v1042
        %v1084 = vpop.f32.mrb[0].mxu0
        %v1085 = vadd.f32 %v1017, %v1084
        %v1086 = vpop.f32.mrb[0].mxu0
        %v1087 = vpop.f32.mrb[0].mxu0
        %v1088 = vadd.f32 %v1020, %v1087
        %v1089 = vpop.f32.mrb[0].mxu0
        %1090 = vmatprep.mubr.bf16.mxu0 0
        %1091 = vmatmul.mubr.bf16.gmra.mrb[0].mxu0 %v1045
        %v1092 = vpop.f32.mrb[0].mxu0
        %v1093 = vadd.f32 %v1025, %v1092
        %v1094 = vpop.f32.mrb[0].mxu0
        %v1095 = vpop.f32.mrb[0].mxu0
        %v1096 = vadd.f32 %v1028, %v1095
        %v1097 = vpop.f32.mrb[0].mxu0
        %1098 = vdwg.mxu0
        %v1099 = vld [vmem:[%s3] sm:$0x1]
        %v1101 = vlaneseq
        %v1102 = vshrl.u32 %v1101, 7
        %v1103 = vsub.s32 0, %v1102
        %v1104 = vrot.slane %v1099, %v1103
        %v1106 = vadd.f32 %v1085, %v1104
        %v1107 = vadd.f32 %v1088, %v1104
        %v1108 = vadd.f32 %v1093, %v1104
        %v1109 = vadd.f32 %v1096, %v1104
        %1110 = vst [vmem:[%s244] sm:$0xff] %v1106
        %1111 = vst [vmem:[%s244 + $0x8] sm:$0xff] %v1107
        %1112 = vst [vmem:[%s244 + $0x10] sm:$0xff] %v1108
        %1113 = vst [vmem:[%s244 + $0x18] sm:$0xff] %v1109
        %s1114 = sand.u32 %s119, 1
        %s1115 = scalar_lea.sflag [#allocation4], %s1114
        %s1116 = sand.u32 %s119, 1
        %s1117 = smul.addr %s1116, 32
        %s1118 = scalar_lea.vmem [#allocation8], %s1117
        // Predicated region
        $region49: #{tpu_custom_call.1} parent=35 // pred_check
          %p1119 = pneg %p129
        $region50: #{tpu_custom_call.1} parent=35 // pred_check_branch
          %1121 = sbr.rel (%p1119) target = $region52
        $region51: #{tpu_custom_call.1} parent=35 // pred_region
          %s1122 = smul.u32 4, %s22
          %s1124 = ssub.s32 512, 512
          %1125 = vsyncadd %s1115, %s1124
          %s1126 = smul.addr %s1122, 128
          %s1127 = scalar_lea.hbm %s4, %s1126
          %s1128 = sshll.u32 %s1118, 4
          %s1129 = int_to_ptr.vmem [resolvable:$true] %s1128
          %1134 = dma.vmem_to_hbm [thread:$0]  %s1129, 512, %s1127, %s1115, 128, 128, 8
        $region52: #{tpu_custom_call.1} parent=35 // pred_fallthru
          _
      $region36: #{tpu_custom_call.1} parent=5 // pred_fallthru
        _
      %p1135 = scmp.le.s32.totalorder 2, %s17
      // Predicated region
      $region53: #{tpu_custom_call.1} parent=5 // pred_check
        %p1136 = pneg %p1135
      $region54: #{tpu_custom_call.1} parent=5 // pred_check_branch
        %1138 = sbr.rel (%p1136) target = $region56
      $region55: #{tpu_custom_call.1} parent=5 // pred_region
        %s1139 = ssub.s32 %s17, 2
        // Predicated region
        $region57: #{tpu_custom_call.1} parent=55 // pred_check
          %p1140 = pneg %p135
        $region58: #{tpu_custom_call.1} parent=55 // pred_check_branch
          %1142 = sbr.rel (%p1140) target = $region60
        $region59: #{tpu_custom_call.1} parent=55 // pred_region
          %s1143 = sand.u32 %s120, 1
          %s1144 = scalar_lea.sflag [#allocation4], %s1143
          %s1145 = sand.u32 %s120, 1
          %s1146 = smul.addr %s1145, 32
          %s1147 = scalar_lea.vmem [#allocation8], %s1146
          %1148 = dma.done %s1144, 512
        $region60: #{tpu_custom_call.1} parent=55 // pred_fallthru
          _
      $region56: #{tpu_custom_call.1} parent=5 // pred_fallthru
        _
    $region6: #{tpu_custom_call.1} parent=1 // loop_footer
      %s21 = sadd.s32 1, %s17
    $region7: #{tpu_custom_call.1} parent=1 // loop_footer_branch
      %16 = sbr.rel target = $region3
    $region8: #{tpu_custom_call.1} parent=1 // loop_exit
      _
    %1149 = vsyncpa [#allocation3], 1
    %s1150 = scalar_lea.sflag [#allocation3], 1
    %1151 = vsyncpa %s1150, 1
    %1152 = vsyncpa [#allocation6], 1
    %1153 = vsyncpa [#allocation4], 1
    %s1154 = scalar_lea.sflag [#allocation4], 1
    %1155 = vsyncpa %s1154, 1

</llo_original>
